<compile_context>
chip_gen: v5e
topology: v5e:2x2
jax: 0.10.0
libtpu: 0.0.40
codegen_flags: <defaults>
</compile_context>

<pallas_src>
import functools

import jax
import jax.numpy as jnp
from jax import lax
from jax.experimental import pallas as pl
from jax.experimental.pallas import tpu as pltpu


# ----------------------------- hyper-params (small, synthetic) ---------------
B = 8                       # batch (sublane-aligned)
C_IN = 4                    # input channels (stand-in; EfficientNet would use 3)
H = W = 16                  # spatial
FEATURE_DIM = 128           # stand-in for 1280
ATTENTION_DIM = FEATURE_DIM # CaFeNet sets attention_dim = feature_dim
NUM_CLASSES = 8
LANE = 128                  # lane width for lane-dense logits output
SCALE = ATTENTION_DIM ** (-0.5)


# ----------------------------- fused kernel ----------------------------------
def cafenet_kernel(x_ref, lbl_ref, wext_ref, bext_ref,
                   centers_ref, cvals_ref, ccnts_ref,
                   wq_ref, wkv_ref, wcls_f_ref, wcls_a_ref, bcls_ref,
                   logits_ref, feat_out_ref,
                   centers_out_ref, cvals_out_ref, ccnts_out_ref,
                   *, scale):
    num_classes, feat_dim = centers_ref.shape
    bsz = lbl_ref.shape[1]

    # ---- stand-in feature extractor: global mean pool + linear projection ----
    pooled = jnp.mean(x_ref[...], axis=-1)                                # [B, C_in]
    feats = (jnp.dot(pooled, wext_ref[...], preferred_element_type=jnp.float32)
             + bext_ref[...])                                             # [B, F]

    # ---- one-hot (transposed, [C, B]) built in-kernel from integer labels ----
    onehot_t = (lbl_ref[...] ==
                lax.broadcasted_iota(jnp.int32, (num_classes, bsz), 0)
                ).astype(jnp.float32)                                     # [C, B]

    # ---- update_center (single batch update of the registered buffers) ----
    class_sum = jnp.dot(onehot_t, feats,
                        preferred_element_type=jnp.float32)               # [C, F]
    batch_counts = jnp.sum(onehot_t, axis=1, keepdims=True)               # [C, 1]

    cvals_new = cvals_ref[...] + class_sum                                # [C, F]
    ccnts_new = ccnts_ref[...] + batch_counts                             # [C, 1]
    present = batch_counts > 0.0                                          # [C, 1]
    inv_counts = pl.reciprocal(jnp.maximum(ccnts_new, 1.0))               # [C, 1]
    centers_new = jnp.where(present, cvals_new * inv_counts,
                            centers_ref[...])                             # [C, F]

    # persist buffer updates (aliased in place onto the inputs)
    centers_out_ref[...] = centers_new
    cvals_out_ref[...] = cvals_new
    ccnts_out_ref[...] = ccnts_new

    # ---- centroid attention ----
    q = jnp.dot(feats, wq_ref[...], preferred_element_type=jnp.float32)   # [B, A]
    kv = jnp.dot(centers_new, wkv_ref[...],
                 preferred_element_type=jnp.float32)                      # [C, 2A]
    att_dim = q.shape[1]
    k = kv[:, :att_dim]                                                   # [C, A]
    v = kv[:, att_dim:]                                                   # [C, A]

    scores = lax.dot_general(q, k, (((1,), (1,)), ((), ())),
                             preferred_element_type=jnp.float32) * scale  # [B, C]
    scores = scores - jnp.max(scores, axis=-1, keepdims=True)
    e = jnp.exp(scores)
    probs = e * pl.reciprocal(jnp.sum(e, axis=-1, keepdims=True),
                              approx=True)                                # softmax
    # attn_drop / proj_drop have p=0.0 -> identity; proj is Identity (A == F).
    attn_vals = jnp.dot(probs, v, preferred_element_type=jnp.float32)     # [B, A]

    # ---- output features: write both halves directly (no lane-axis concat) ----
    feat_out_ref[:, :feat_dim] = feats
    feat_out_ref[:, feat_dim:] = attn_vals

    # ---- classifier split across the concat boundary, lane-dense logits ----
    logits_ref[...] = (
        jnp.dot(feats, wcls_f_ref[...], preferred_element_type=jnp.float32)
        + jnp.dot(attn_vals, wcls_a_ref[...], preferred_element_type=jnp.float32)
        + bcls_ref[...]
    )                                                                     # [B, LANE]


# ----------------------------- wrapper ----------------------------------------
_VMEM = pl.BlockSpec(memory_space=pltpu.MemorySpace.VMEM)


def cafenet_pallas(x, labels, params):
    b, c_in, h, w = x.shape
    x_flat = x.reshape(b, c_in, h * w)
    labels_row = labels.reshape(1, b).astype(jnp.int32)
    kernel = functools.partial(cafenet_kernel, scale=SCALE)

    logits_pad, out_feat, centers_new, cvals_new, ccnts_new = pl.pallas_call(
        kernel,
        out_shape=(
            jax.ShapeDtypeStruct((b, LANE), jnp.float32),                  # padded logits
            jax.ShapeDtypeStruct((b, 2 * FEATURE_DIM), jnp.float32),       # features
            jax.ShapeDtypeStruct((NUM_CLASSES, FEATURE_DIM), jnp.float32), # centers
            jax.ShapeDtypeStruct((NUM_CLASSES, FEATURE_DIM), jnp.float32), # center_values
            jax.ShapeDtypeStruct((NUM_CLASSES, 1), jnp.float32),           # center_counts
        ),
        in_specs=[_VMEM] * 12,
        out_specs=(_VMEM,) * 5,
        # persist centroid buffers in place (PyTorch registered-buffer semantics)
        input_output_aliases={4: 2, 5: 3, 6: 4},
    )(
        x_flat, labels_row,
        params["w_ext"], params["b_ext"],
        params["centers"], params["center_values"], params["center_counts"],
        params["wq"], params["wkv"],
        params["wcls_f"], params["wcls_a"], params["bcls_pad"],
    )

    logits = logits_pad[:, :NUM_CLASSES]
    new_state = {
        "centers": centers_new,
        "center_values": cvals_new,
        "center_counts": ccnts_new,
    }
    return logits, out_feat, new_state


@jax.jit
def cafenet_forward(x, labels, params):
    return cafenet_pallas(x, labels, params)


# ----------------------------- deterministic param init -----------------------
def init_params(key):
    ks = jax.random.split(key, 6)
    std = 0.02

    wk = jax.random.normal(ks[2], (FEATURE_DIM, ATTENTION_DIM), jnp.float32) * std
    wv = jax.random.normal(ks[3], (FEATURE_DIM, ATTENTION_DIM), jnp.float32) * std
    wcls = jax.random.normal(ks[4], (2 * FEATURE_DIM, NUM_CLASSES), jnp.float32) * std
    pad_cols = LANE - NUM_CLASSES

    params = {
        # stand-in extractor
        "w_ext": jax.random.normal(ks[0], (C_IN, FEATURE_DIM), jnp.float32) * std,
        "b_ext": jnp.zeros((1, FEATURE_DIM), jnp.float32),
        # CentroidAttention buffers (registered buffers start at zero)
        "centers": jnp.zeros((NUM_CLASSES, FEATURE_DIM), jnp.float32),
        "center_values": jnp.zeros((NUM_CLASSES, FEATURE_DIM), jnp.float32),
        "center_counts": jnp.zeros((NUM_CLASSES, 1), jnp.float32),
        # q linear + fused k/v linear (bias=False), stored as [in, out]
        "wq": jax.random.normal(ks[1], (FEATURE_DIM, ATTENTION_DIM), jnp.float32) * std,
        "wkv": jnp.concatenate([wk, wv], axis=1),                    # [F, 2A]
        # classifier Linear(2F -> C), split across the concat boundary and
        # zero-padded to a lane-dense [F, 128] so the logits store is unmasked.
        "wcls_f": jnp.pad(wcls[:FEATURE_DIM], ((0, 0), (0, pad_cols))),
        "wcls_a": jnp.pad(wcls[FEATURE_DIM:], ((0, 0), (0, pad_cols))),
        "bcls_pad": jnp.zeros((1, LANE), jnp.float32),
    }
    return params


# ----------------------------- main -------------------------------------------
if __name__ == "__main__":
    key = jax.random.PRNGKey(0)
    k_x, k_lbl, k_p = jax.random.split(key, 3)

    x = jax.random.normal(k_x, (B, C_IN, H, W), jnp.float32)      # NCHW
    labels = jax.random.randint(k_lbl, (B,), 0, NUM_CLASSES, jnp.int32)
    params = init_params(k_p)

    logits, features, new_state = cafenet_forward(x, labels, params)
    jax.block_until_ready((logits, features, new_state))

    assert logits.shape == (B, NUM_CLASSES)
    assert features.shape == (B, 2 * FEATURE_DIM)
    assert new_state["centers"].shape == (NUM_CLASSES, FEATURE_DIM)
    assert new_state["center_values"].shape == (NUM_CLASSES, FEATURE_DIM)
    assert new_state["center_counts"].shape == (NUM_CLASSES, 1)
    assert bool(jnp.all(jnp.isfinite(logits)))
    assert bool(jnp.all(jnp.isfinite(features)))
    assert bool(jnp.all(jnp.isfinite(new_state["centers"])))

    print("KERNEL_OK")
</pallas_src>

<mosaic_0001>
module attributes {stable_mosaic.version = 11 : i64} {
  func.func @cafenet_kernel(%arg0: memref<8x4x256xf32, #tpu.memory_space<vmem>>, %arg1: memref<1x8xi32, #tpu.memory_space<vmem>>, %arg2: memref<4x128xf32, #tpu.memory_space<vmem>>, %arg3: memref<1x128xf32, #tpu.memory_space<vmem>>, %arg4: memref<8x128xf32, #tpu.memory_space<vmem>>, %arg5: memref<8x128xf32, #tpu.memory_space<vmem>>, %arg6: memref<8x1xf32, #tpu.memory_space<vmem>>, %arg7: memref<128x128xf32, #tpu.memory_space<vmem>>, %arg8: memref<128x256xf32, #tpu.memory_space<vmem>>, %arg9: memref<128x128xf32, #tpu.memory_space<vmem>>, %arg10: memref<128x128xf32, #tpu.memory_space<vmem>>, %arg11: memref<1x128xf32, #tpu.memory_space<vmem>>, %arg12: memref<8x128xf32, #tpu.memory_space<vmem>>, %arg13: memref<8x256xf32, #tpu.memory_space<vmem>>, %arg14: memref<8x128xf32, #tpu.memory_space<vmem>>, %arg15: memref<8x128xf32, #tpu.memory_space<vmem>>, %arg16: memref<8x1xf32, #tpu.memory_space<vmem>>) attributes {dimension_semantics = [], scalar_prefetch = 0 : i64, scratch_operands = 0 : i64, tpu.core_type = #tpu.core_type<tc>} {
    %c0 = arith.constant 0 : index
    %c0_0 = arith.constant 0 : index
    %c0_1 = arith.constant 0 : index
    %0 = vector.load %arg0[%c0, %c0_0, %c0_1] : memref<8x4x256xf32, #tpu.memory_space<vmem>>, vector<8x4x256xf32>
    %cst = arith.constant dense<0.000000e+00> : vector<8x4xf32>
    %1 = vector.multi_reduction <add>, %0, %cst [2] : vector<8x4x256xf32> to vector<8x4xf32>
    %cst_2 = arith.constant 2.560000e+02 : f32
    %2 = vector.broadcast %cst_2 : f32 to vector<8x4xf32>
    %3 = arith.divf %1, %2 : vector<8x4xf32>
    %c0_3 = arith.constant 0 : index
    %c0_4 = arith.constant 0 : index
    %4 = vector.load %arg2[%c0_3, %c0_4] : memref<4x128xf32, #tpu.memory_space<vmem>>, vector<4x128xf32>
    %cst_5 = arith.constant dense<0.000000e+00> : vector<8x128xf32>
    %5 = tpu.matmul %3, %4, %cst_5 {dimension_numbers = #tpu.dot_dimension_numbers<[1], [0], [0], [1], [0, 0, 1, 1], [], []>} : vector<8x4xf32>, vector<4x128xf32>, vector<8x128xf32> -> vector<8x128xf32>
    %c0_6 = arith.constant 0 : index
    %c0_7 = arith.constant 0 : index
    %6 = vector.load %arg3[%c0_6, %c0_7] : memref<1x128xf32, #tpu.memory_space<vmem>>, vector<1x128xf32>
    %7 = vector.broadcast %6 : vector<1x128xf32> to vector<8x128xf32>
    %8 = arith.addf %5, %7 : vector<8x128xf32>
    %c0_8 = arith.constant 0 : index
    %c0_9 = arith.constant 0 : index
    %9 = vector.load %arg1[%c0_8, %c0_9] : memref<1x8xi32, #tpu.memory_space<vmem>>, vector<1x8xi32>
    %10 = tpu.iota {dimensions = array<i32: 0>} : vector<8x8xi32>
    %11 = vector.broadcast %9 : vector<1x8xi32> to vector<8x8xi32>
    %12 = arith.cmpi eq, %11, %10 : vector<8x8xi32>
    %13 = arith.extui %12 : vector<8x8xi1> to vector<8x8xi32>
    %14 = arith.sitofp %13 : vector<8x8xi32> to vector<8x8xf32>
    %cst_10 = arith.constant dense<0.000000e+00> : vector<8x128xf32>
    %15 = tpu.matmul %14, %8, %cst_10 {dimension_numbers = #tpu.dot_dimension_numbers<[1], [0], [0], [1], [0, 0, 1, 1], [], []>} : vector<8x8xf32>, vector<8x128xf32>, vector<8x128xf32> -> vector<8x128xf32>
    %cst_11 = arith.constant dense<0.000000e+00> : vector<8xf32>
    %16 = vector.multi_reduction <add>, %14, %cst_11 [1] : vector<8x8xf32> to vector<8xf32>
    %17 = vector.shape_cast %16 : vector<8xf32> to vector<8x1xf32>
    %c0_12 = arith.constant 0 : index
    %c0_13 = arith.constant 0 : index
    %18 = vector.load %arg5[%c0_12, %c0_13] : memref<8x128xf32, #tpu.memory_space<vmem>>, vector<8x128xf32>
    %19 = arith.addf %18, %15 : vector<8x128xf32>
    %c0_14 = arith.constant 0 : index
    %c0_15 = arith.constant 0 : index
    %20 = vector.load %arg6[%c0_14, %c0_15] : memref<8x1xf32, #tpu.memory_space<vmem>>, vector<8x1xf32>
    %21 = arith.addf %20, %17 : vector<8x1xf32>
    %cst_16 = arith.constant 0.000000e+00 : f32
    %22 = vector.broadcast %cst_16 : f32 to vector<8x1xf32>
    %23 = arith.cmpf ogt, %17, %22 : vector<8x1xf32>
    %cst_17 = arith.constant 1.000000e+00 : f32
    %24 = vector.broadcast %cst_17 : f32 to vector<8x1xf32>
    %25 = arith.maximumf %21, %24 : vector<8x1xf32>
    %26 = tpu.reciprocal %25 : vector<8x1xf32> -> vector<8x1xf32>
    %27 = vector.broadcast %26 : vector<8x1xf32> to vector<8x128xf32>
    %28 = arith.mulf %19, %27 : vector<8x128xf32>
    %c0_18 = arith.constant 0 : index
    %c0_19 = arith.constant 0 : index
    %29 = vector.load %arg4[%c0_18, %c0_19] : memref<8x128xf32, #tpu.memory_space<vmem>>, vector<8x128xf32>
    %30 = vector.shape_cast %23 : vector<8x1xi1> to vector<8x1xi1>
    %31 = vector.broadcast %30 : vector<8x1xi1> to vector<8x128xi1>
    %32 = arith.select %31, %28, %29 : vector<8x128xi1>, vector<8x128xf32>
    %c0_20 = arith.constant 0 : index
    %c0_21 = arith.constant 0 : index
    %33 = vector.load %arg14[%c0_20, %c0_21] : memref<8x128xf32, #tpu.memory_space<vmem>>, vector<8x128xf32>
    tpu.vector_store %arg14[%c0_20, %c0_21], %32 {strides = array<i32>} : memref<8x128xf32, #tpu.memory_space<vmem>>, vector<8x128xf32>,
    %c0_22 = arith.constant 0 : index
    %c0_23 = arith.constant 0 : index
    %34 = vector.load %arg15[%c0_22, %c0_23] : memref<8x128xf32, #tpu.memory_space<vmem>>, vector<8x128xf32>
    tpu.vector_store %arg15[%c0_22, %c0_23], %19 {strides = array<i32>} : memref<8x128xf32, #tpu.memory_space<vmem>>, vector<8x128xf32>,
    %c0_24 = arith.constant 0 : index
    %c0_25 = arith.constant 0 : index
    %35 = vector.load %arg16[%c0_24, %c0_25] : memref<8x1xf32, #tpu.memory_space<vmem>>, vector<8x1xf32>
    tpu.vector_store %arg16[%c0_24, %c0_25], %21 {strides = array<i32>} : memref<8x1xf32, #tpu.memory_space<vmem>>, vector<8x1xf32>,
    %c0_26 = arith.constant 0 : index
    %c0_27 = arith.constant 0 : index
    %36 = vector.load %arg7[%c0_26, %c0_27] : memref<128x128xf32, #tpu.memory_space<vmem>>, vector<128x128xf32>
    %cst_28 = arith.constant dense<0.000000e+00> : vector<8x128xf32>
    %37 = tpu.matmul %8, %36, %cst_28 {dimension_numbers = #tpu.dot_dimension_numbers<[1], [0], [0], [1], [0, 0, 1, 1], [], []>} : vector<8x128xf32>, vector<128x128xf32>, vector<8x128xf32> -> vector<8x128xf32>
    %c0_29 = arith.constant 0 : index
    %c0_30 = arith.constant 0 : index
    %38 = vector.load %arg8[%c0_29, %c0_30] : memref<128x256xf32, #tpu.memory_space<vmem>>, vector<128x256xf32>
    %cst_31 = arith.constant dense<0.000000e+00> : vector<8x256xf32>
    %39 = tpu.matmul %32, %38, %cst_31 {dimension_numbers = #tpu.dot_dimension_numbers<[1], [0], [0], [1], [0, 0, 1, 1], [], []>} : vector<8x128xf32>, vector<128x256xf32>, vector<8x256xf32> -> vector<8x256xf32>
    %40 = vector.extract_strided_slice %39 {offsets = [0, 0], sizes = [8, 128], strides = [1, 1]} : vector<8x256xf32> to vector<8x128xf32>
    %41 = vector.extract_strided_slice %39 {offsets = [0, 128], sizes = [8, 128], strides = [1, 1]} : vector<8x256xf32> to vector<8x128xf32>
    %cst_32 = arith.constant dense<0.000000e+00> : vector<8x8xf32>
    %42 = tpu.matmul %37, %40, %cst_32 {dimension_numbers = #tpu.dot_dimension_numbers<[1], [1], [0], [0], [0, 0, 1, 0], [], []>} : vector<8x128xf32>, vector<8x128xf32>, vector<8x8xf32> -> vector<8x8xf32>
    %cst_33 = arith.constant 0.0883883461 : f32
    %43 = vector.broadcast %cst_33 : f32 to vector<8x8xf32>
    %44 = arith.mulf %42, %43 : vector<8x8xf32>
    %cst_34 = arith.constant dense<0xFF800000> : vector<8xf32>
    %45 = vector.multi_reduction <maximumf>, %44, %cst_34 [1] : vector<8x8xf32> to vector<8xf32>
    %46 = vector.shape_cast %45 : vector<8xf32> to vector<8x1xf32>
    %47 = vector.broadcast %46 : vector<8x1xf32> to vector<8x8xf32>
    %48 = arith.subf %44, %47 : vector<8x8xf32>
    %49 = math.exp %48 : vector<8x8xf32>
    %cst_35 = arith.constant dense<0.000000e+00> : vector<8xf32>
    %50 = vector.multi_reduction <add>, %49, %cst_35 [1] : vector<8x8xf32> to vector<8xf32>
    %51 = vector.shape_cast %50 : vector<8xf32> to vector<8x1xf32>
    %52 = tpu.reciprocal %51 {approx = true} : vector<8x1xf32> -> vector<8x1xf32>
    %53 = vector.broadcast %52 : vector<8x1xf32> to vector<8x8xf32>
    %54 = arith.mulf %49, %53 : vector<8x8xf32>
    %cst_36 = arith.constant dense<0.000000e+00> : vector<8x128xf32>
    %55 = tpu.matmul %54, %41, %cst_36 {dimension_numbers = #tpu.dot_dimension_numbers<[1], [0], [0], [1], [0, 0, 1, 1], [], []>} : vector<8x8xf32>, vector<8x128xf32>, vector<8x128xf32> -> vector<8x128xf32>
    %c0_37 = arith.constant 0 : index
    %c0_38 = arith.constant 0 : index
    %56 = vector.load %arg13[%c0_37, %c0_38] : memref<8x256xf32, #tpu.memory_space<vmem>>, vector<8x128xf32>
    tpu.vector_store %arg13[%c0_37, %c0_38], %8 {strides = array<i32>} : memref<8x256xf32, #tpu.memory_space<vmem>>, vector<8x128xf32>,
    %c0_39 = arith.constant 0 : index
    %c128 = arith.constant 128 : index
    %57 = vector.load %arg13[%c0_39, %c128] : memref<8x256xf32, #tpu.memory_space<vmem>>, vector<8x128xf32>
    tpu.vector_store %arg13[%c0_39, %c128], %55 {strides = array<i32>} : memref<8x256xf32, #tpu.memory_space<vmem>>, vector<8x128xf32>,
    %c0_40 = arith.constant 0 : index
    %c0_41 = arith.constant 0 : index
    %58 = vector.load %arg9[%c0_40, %c0_41] : memref<128x128xf32, #tpu.memory_space<vmem>>, vector<128x128xf32>
    %cst_42 = arith.constant dense<0.000000e+00> : vector<8x128xf32>
    %59 = tpu.matmul %8, %58, %cst_42 {dimension_numbers = #tpu.dot_dimension_numbers<[1], [0], [0], [1], [0, 0, 1, 1], [], []>} : vector<8x128xf32>, vector<128x128xf32>, vector<8x128xf32> -> vector<8x128xf32>
    %c0_43 = arith.constant 0 : index
    %c0_44 = arith.constant 0 : index
    %60 = vector.load %arg10[%c0_43, %c0_44] : memref<128x128xf32, #tpu.memory_space<vmem>>, vector<128x128xf32>
    %cst_45 = arith.constant dense<0.000000e+00> : vector<8x128xf32>
    %61 = tpu.matmul %55, %60, %cst_45 {dimension_numbers = #tpu.dot_dimension_numbers<[1], [0], [0], [1], [0, 0, 1, 1], [], []>} : vector<8x128xf32>, vector<128x128xf32>, vector<8x128xf32> -> vector<8x128xf32>
    %62 = arith.addf %59, %61 : vector<8x128xf32>
    %c0_46 = arith.constant 0 : index
    %c0_47 = arith.constant 0 : index
    %63 = vector.load %arg11[%c0_46, %c0_47] : memref<1x128xf32, #tpu.memory_space<vmem>>, vector<1x128xf32>
    %64 = vector.broadcast %63 : vector<1x128xf32> to vector<8x128xf32>
    %65 = arith.addf %62, %64 : vector<8x128xf32>
    %c0_48 = arith.constant 0 : index
    %c0_49 = arith.constant 0 : index
    %66 = vector.load %arg12[%c0_48, %c0_49] : memref<8x128xf32, #tpu.memory_space<vmem>>, vector<8x128xf32>
    tpu.vector_store %arg12[%c0_48, %c0_49], %65 {strides = array<i32>} : memref<8x128xf32, #tpu.memory_space<vmem>>, vector<8x128xf32>,
    return
  }
}

</mosaic_0001>

<llo_original>
// kernel: cafenet_forward.1
$region0: #{cafenet_forward.1}
  #allocation0 [shape = 'u32[]', space=smem, size = 0x4, offset = 0x4, fixed_abs, tag = 'smem constant byte address 0x4 - core index']
  #allocation1 [shape = 'u32[72,128]{1,0:T(1,128)}', space=vmem, size = 0x9000, scoped, tag = 'internal scratch']
  %s0 = inlined_call_operand.vmem [shape: f32[8,4,256], index: 0, kind: input, shape index: {}]
  %s1 = inlined_call_operand.vmem [shape: s32[1,8], index: 1, kind: input, shape index: {}]
  %s2 = inlined_call_operand.vmem [shape: f32[4,128], index: 2, kind: input, shape index: {}]
  %s3 = inlined_call_operand.vmem [shape: f32[1,128], index: 3, kind: input, shape index: {}]
  %s4 = inlined_call_operand.vmem [shape: f32[8,128], index: 4, kind: input, shape index: {}, may-alias: {4,14}]
  %s5 = inlined_call_operand.vmem [shape: f32[8,128], index: 5, kind: input, shape index: {}, may-alias: {5,15}]
  %s6 = inlined_call_operand.vmem [shape: f32[8,1], index: 6, kind: input, shape index: {}, may-alias: {6,16}]
  %s7 = inlined_call_operand.vmem [shape: f32[128,128], index: 7, kind: input, shape index: {}]
  %s8 = inlined_call_operand.vmem [shape: f32[128,256], index: 8, kind: input, shape index: {}]
  %s9 = inlined_call_operand.vmem [shape: f32[128,128], index: 9, kind: input, shape index: {}]
  %s10 = inlined_call_operand.hbm [shape: f32[128,128], index: 10, kind: input, shape index: {}]
  %s11 = inlined_call_operand.vmem [shape: f32[1,128], index: 11, kind: input, shape index: {}]
  %s12 = inlined_call_operand.hbm [shape: f32[8,128], index: 12, kind: output, shape index: {0}]
  %s13 = inlined_call_operand.hbm [shape: f32[8,256], index: 13, kind: output, shape index: {1}]
  %s14 = inlined_call_operand.vmem [shape: f32[8,128], index: 14, kind: output, shape index: {2}, may-alias: {4,14}]
  %s15 = inlined_call_operand.vmem [shape: f32[8,128], index: 15, kind: output, shape index: {3}, may-alias: {5,15}]
  %s16 = inlined_call_operand.vmem [shape: f32[8,1], index: 16, kind: output, shape index: {4}, may-alias: {6,16}]
  %17 = xla_tuple %s12, %s13, %s14, %s15, %s16
  %s18 = sld [smem:[#allocation0]]
  $region94: #{cafenet_forward.1} parent=0
    _
  %s20 = ssub.s32 1, %s18
  %s21 = scalar_select 0, %s20, %s18
  $region1: #{cafenet_forward.1} parent=0
    #allocation2 [shape = 'u8[65536]{0}', space=vmem, size = 0x10000, scoped, tag = 'input window, operand 10, single buffered']
    #allocation3 [shape = 's32[1]{0}', space=sflag, size = 0x4, scoped, tag = 'scoped memory for cafenet_forward.1']
    #allocation4 [shape = 's32[1]{0}', space=sflag, size = 0x4, scoped, tag = 'scoped memory for cafenet_forward.1']
    #allocation5 [shape = 'u8[4096]{0}', space=vmem, size = 0x1000, scoped, tag = 'output window, operand 0, single buffered']
    #allocation6 [shape = 'u8[8192]{0}', space=vmem, size = 0x2000, scoped, tag = 'output window, operand 1, single buffered']
    #allocation7 [shape = 's32[1]{0}', space=sflag, size = 0x4, scoped, tag = 'scoped memory for cafenet_forward.1']
    %22 = vsyncpa [#allocation3], 0
    %23 = vsyncpa [#allocation4], 0
    %24 = vsyncpa [#allocation7], 0
    // Predicated region
    $region2: #{cafenet_forward.1} parent=1 // pred_check
      _
    $region3: #{cafenet_forward.1} parent=1 // pred_check_branch
      %26 = sbr.rel (0) target = $region5
    $region4: #{cafenet_forward.1} parent=1 // pred_region
      _
    $region5: #{cafenet_forward.1} parent=1 // pred_fallthru
      _
    // Predicated region
    $region6: #{cafenet_forward.1} parent=1 // pred_check
      _
    $region7: #{cafenet_forward.1} parent=1 // pred_check_branch
      %28 = sbr.rel (0) target = $region9
    $region8: #{cafenet_forward.1} parent=1 // pred_region
      _
    $region9: #{cafenet_forward.1} parent=1 // pred_fallthru
      _
    // Predicated region
    $region10: #{cafenet_forward.1} parent=1 // pred_check
      _
    $region11: #{cafenet_forward.1} parent=1 // pred_check_branch
      %30 = sbr.rel (0) target = $region13
    $region12: #{cafenet_forward.1} parent=1 // pred_region
      _
    $region13: #{cafenet_forward.1} parent=1 // pred_fallthru
      _
    // Predicated region
    $region14: #{cafenet_forward.1} parent=1 // pred_check
      _
    $region15: #{cafenet_forward.1} parent=1 // pred_check_branch
      %32 = sbr.rel (0) target = $region17
    $region16: #{cafenet_forward.1} parent=1 // pred_region
      _
    $region17: #{cafenet_forward.1} parent=1 // pred_fallthru
      _
    // Predicated region
    $region18: #{cafenet_forward.1} parent=1 // pred_check
      _
    $region19: #{cafenet_forward.1} parent=1 // pred_check_branch
      %34 = sbr.rel (0) target = $region21
    $region20: #{cafenet_forward.1} parent=1 // pred_region
      _
    $region21: #{cafenet_forward.1} parent=1 // pred_fallthru
      _
    // Predicated region
    $region22: #{cafenet_forward.1} parent=1 // pred_check
      _
    $region23: #{cafenet_forward.1} parent=1 // pred_check_branch
      %36 = sbr.rel (0) target = $region25
    $region24: #{cafenet_forward.1} parent=1 // pred_region
      _
    $region25: #{cafenet_forward.1} parent=1 // pred_fallthru
      _
    // Predicated region
    $region26: #{cafenet_forward.1} parent=1 // pred_check
      _
    $region27: #{cafenet_forward.1} parent=1 // pred_check_branch
      %38 = sbr.rel (0) target = $region29
    $region28: #{cafenet_forward.1} parent=1 // pred_region
      _
    $region29: #{cafenet_forward.1} parent=1 // pred_fallthru
      _
    // Predicated region
    $region30: #{cafenet_forward.1} parent=1 // pred_check
      _
    $region31: #{cafenet_forward.1} parent=1 // pred_check_branch
      %40 = sbr.rel (0) target = $region33
    $region32: #{cafenet_forward.1} parent=1 // pred_region
      _
    $region33: #{cafenet_forward.1} parent=1 // pred_fallthru
      _
    // Predicated region
    $region34: #{cafenet_forward.1} parent=1 // pred_check
      _
    $region35: #{cafenet_forward.1} parent=1 // pred_check_branch
      %42 = sbr.rel (0) target = $region37
    $region36: #{cafenet_forward.1} parent=1 // pred_region
      _
    $region37: #{cafenet_forward.1} parent=1 // pred_fallthru
      _
    // Predicated region
    $region38: #{cafenet_forward.1} parent=1 // pred_check
      _
    $region39: #{cafenet_forward.1} parent=1 // pred_check_branch
      %44 = sbr.rel (0) target = $region41
    $region40: #{cafenet_forward.1} parent=1 // pred_region
      _
    $region41: #{cafenet_forward.1} parent=1 // pred_fallthru
      _
    // Predicated region
    $region42: #{cafenet_forward.1} parent=1 // pred_check
      _
    $region43: #{cafenet_forward.1} parent=1 // pred_check_branch
      %46 = sbr.rel (0) target = $region45
    $region44: #{cafenet_forward.1} parent=1 // pred_region
      %48 = vsyncadd [#allocation3], 0
      %s49 = sshll.u32 %s10, 4
      %s50 = int_to_ptr.hbm [resolvable:$true] %s49
      %s51 = sshll.u32 [#allocation2], 4
      %s52 = int_to_ptr.vmem [resolvable:$true] %s51
      %57 = dma.hbm_to_vmem [thread:$0]  %s50, 2048, %s52, [#allocation3], 128, 128, 8
    $region45: #{cafenet_forward.1} parent=1 // pred_fallthru
      _
    // Predicated region
    $region46: #{cafenet_forward.1} parent=1 // pred_check
      _
    $region47: #{cafenet_forward.1} parent=1 // pred_check_branch
      %59 = sbr.rel (0) target = $region49
    $region48: #{cafenet_forward.1} parent=1 // pred_region
      _
    $region49: #{cafenet_forward.1} parent=1 // pred_fallthru
      _
    // Predicated region
    $region50: #{cafenet_forward.1} parent=1 // pred_check
      _
    $region51: #{cafenet_forward.1} parent=1 // pred_check_branch
      %61 = sbr.rel (0) target = $region53
    $region52: #{cafenet_forward.1} parent=1 // pred_region
      %63 = dma.done [#allocation3], 2048
    $region53: #{cafenet_forward.1} parent=1 // pred_fallthru
      _
    %v64 = vld [vmem:[%s0] sm:$0xff]
    %v65 = vld [vmem:[%s0 + $0x8] sm:$0xff]
    %v66 = vld [vmem:[%s0 + $0x10] sm:$0xff]
    %v67 = vld [vmem:[%s0 + $0x18] sm:$0xff]
    %v68 = vld [vmem:[%s0 + $0x20] sm:$0xff]
    %v69 = vld [vmem:[%s0 + $0x28] sm:$0xff]
    %v70 = vld [vmem:[%s0 + $0x30] sm:$0xff]
    %v71 = vld [vmem:[%s0 + $0x38] sm:$0xff]
    %80 = vst [vmem:[#allocation1] ss:$2 sm:$0xff] %v64
    %v81 = vld.sshfl [vmem:[#allocation1] sm:$0xff pattern:$0x75316420]
    %v82 = vld.sshfl [vmem:[#allocation1 + $0x8] sm:$0xff pattern:$0x75316420]
    %s83 = scalar_lea.vmem [#allocation1], 16
    %84 = vst [vmem:[%s83] ss:$2 sm:$0xff] %v65
    %v85 = vld.sshfl [vmem:[#allocation1 + $0x10] sm:$0xff pattern:$0x75316420]
    %v86 = vld.sshfl [vmem:[#allocation1 + $0x18] sm:$0xff pattern:$0x75316420]
    %s87 = scalar_lea.vmem [#allocation1], 32
    %88 = vst [vmem:[%s87] ss:$2 sm:$0xff] %v66
    %v89 = vld.sshfl [vmem:[#allocation1 + $0x20] sm:$0xff pattern:$0x75316420]
    %v90 = vld.sshfl [vmem:[#allocation1 + $0x28] sm:$0xff pattern:$0x75316420]
    %s91 = scalar_lea.vmem [#allocation1], 48
    %92 = vst [vmem:[%s91] ss:$2 sm:$0xff] %v67
    %v93 = vld.sshfl [vmem:[#allocation1 + $0x30] sm:$0xff pattern:$0x75316420]
    %v94 = vld.sshfl [vmem:[#allocation1 + $0x38] sm:$0xff pattern:$0x75316420]
    %95 = vst [vmem:[#allocation1] ss:$2 sm:$0xff] %v68
    %v96 = vld.sshfl [vmem:[#allocation1] sm:$0xff pattern:$0x75316420]
    %v97 = vld.sshfl [vmem:[#allocation1 + $0x8] sm:$0xff pattern:$0x75316420]
    %98 = vst [vmem:[%s83] ss:$2 sm:$0xff] %v69
    %v99 = vld.sshfl [vmem:[#allocation1 + $0x10] sm:$0xff pattern:$0x75316420]
    %v100 = vld.sshfl [vmem:[#allocation1 + $0x18] sm:$0xff pattern:$0x75316420]
    %101 = vst [vmem:[%s87] ss:$2 sm:$0xff] %v70
    %v102 = vld.sshfl [vmem:[#allocation1 + $0x20] sm:$0xff pattern:$0x75316420]
    %v103 = vld.sshfl [vmem:[#allocation1 + $0x28] sm:$0xff pattern:$0x75316420]
    %104 = vst [vmem:[%s91] ss:$2 sm:$0xff] %v71
    %v105 = vld.sshfl [vmem:[#allocation1 + $0x30] sm:$0xff pattern:$0x75316420]
    %v106 = vld.sshfl [vmem:[#allocation1 + $0x38] sm:$0xff pattern:$0x75316420]
    %vm123 = vcmask 1043456
    %v124 = vsel %vm123, %v81, 0.0
    %v125 = vsel %vm123, %v82, 0.0
    %v126 = vadd.f32 %v124, %v125
    %127 = vadd.xlane.f32.xlu0 %v126
    %v128 = vpop.xlane.xlu0 %127
    %v129 = vsel %vm123, %v85, 0.0
    %v130 = vsel %vm123, %v86, 0.0
    %v131 = vadd.f32 %v129, %v130
    %132 = vadd.xlane.f32.xlu0 %v131
    %v133 = vpop.xlane.xlu0 %132
    %v134 = vsel %vm123, %v89, 0.0
    %v135 = vsel %vm123, %v90, 0.0
    %v136 = vadd.f32 %v134, %v135
    %137 = vadd.xlane.f32.xlu0 %v136
    %v138 = vpop.xlane.xlu0 %137
    %v139 = vsel %vm123, %v93, 0.0
    %v140 = vsel %vm123, %v94, 0.0
    %v141 = vadd.f32 %v139, %v140
    %142 = vadd.xlane.f32.xlu0 %v141
    %v143 = vpop.xlane.xlu0 %142
    %v144 = vsel %vm123, %v96, 0.0
    %v145 = vsel %vm123, %v97, 0.0
    %v146 = vadd.f32 %v144, %v145
    %147 = vadd.xlane.f32.xlu0 %v146
    %v148 = vpop.xlane.xlu0 %147
    %v149 = vsel %vm123, %v99, 0.0
    %v150 = vsel %vm123, %v100, 0.0
    %v151 = vadd.f32 %v149, %v150
    %152 = vadd.xlane.f32.xlu0 %v151
    %v153 = vpop.xlane.xlu0 %152
    %v154 = vsel %vm123, %v102, 0.0
    %v155 = vsel %vm123, %v103, 0.0
    %v156 = vadd.f32 %v154, %v155
    %157 = vadd.xlane.f32.xlu0 %v156
    %v158 = vpop.xlane.xlu0 %157
    %v159 = vsel %vm123, %v105, 0.0
    %v160 = vsel %vm123, %v106, 0.0
    %v161 = vadd.f32 %v159, %v160
    %162 = vadd.xlane.f32.xlu0 %v161
    %v163 = vpop.xlane.xlu0 %162
    %v164 = vrcp.pop 256.0
    %v165 = vmul.f32 256.0, %v164
    %v166 = vsub.f32 1.0, %v165
    %v167 = vmul.f32 %v164, %v166
    %v168 = vadd.f32 %v164, %v167
    %vm169 = vweird.f32 %v164
    %v170 = vsel %vm169, %v164, %v168
    %v171 = vmul.f32 %v128, %v170
    %v172 = vmul.f32 %v133, %v170
    %v173 = vmul.f32 %v138, %v170
    %v174 = vmul.f32 %v143, %v170
    %v175 = vmul.f32 %v148, %v170
    %v176 = vmul.f32 %v153, %v170
    %v177 = vmul.f32 %v158, %v170
    %v178 = vmul.f32 %v163, %v170
    %v179 = vld [vmem:[%s2] sm:$0xf]
    %v180 = vld [vmem:[%s3] sm:$0x1]
    %v182 = vperm.slane %v180, 0
    %v192 = vlaneseq
    %v193 = vand.u32 %v192, 127
    %v194 = vperm.slane %v171, %v193
    %v195 = vperm.slane %v172, %v193
    %v196 = vperm.slane %v173, %v193
    %v197 = vperm.slane %v174, %v193
    %v198 = vperm.slane %v175, %v193
    %v199 = vperm.slane %v176, %v193
    %v200 = vperm.slane %v177, %v193
    %v201 = vperm.slane %v178, %v193
    %vm202 = vcmask 1041409
    %v203 = vsel %vm202, %v195, %v194
    %vm204 = vcmask 1042434
    %v205 = vsel %vm204, %v196, %v203
    %vm206 = vcmask 1043459
    %v207 = vsel %vm206, %v197, %v205
    %vm208 = vcmask 1044484
    %v209 = vsel %vm208, %v198, %v207
    %vm210 = vcmask 1045509
    %v211 = vsel %vm210, %v199, %v209
    %vm212 = vcmask 1046534
    %v213 = vsel %vm212, %v200, %v211
    %vm214 = vcmask 1047559
    %v215 = vsel %vm214, %v201, %v213
    %vm216 = vcmask 31744
    %v217 = vsel %vm216, %v215, 0
    %v220 = vsel %vm123, %v179, 0
    %222 = vmatpush.msra.mxu0 0.0
    %223 = vmatpush.msra.mxu0 0.0
    %224 = vmatpush.msra.mxu0 0.0
    %225 = vmatpush.msra.mxu0 0.0
    %226 = vmatpush.msra.mxu0 0.0
    %227 = vmatpush.msra.mxu0 0.0
    %228 = vmatpush.msra.mxu0 0.0
    %229 = vmatpush.msra.mxu0 0.0
    %230 = vmatpush.msra.mxu0 0.0
    %231 = vmatpush.msra.mxu0 0.0
    %232 = vmatpush.msra.mxu0 0.0
    %233 = vmatpush.msra.mxu0 0.0
    %234 = vmatpush.msra.mxu0 0.0
    %235 = vmatpush.msra.mxu0 0.0
    %236 = vmatpush.msra.mxu0 0.0
    %237 = vmatpush.msra.mxu0 %v220
    %238 = vmatmul.f32.gmra.mxu0 %v217
    %v239 = vpop.f32.mrf.mxu0
    %v240 = vadd.f32 %v182, %v239
    %241 = vdwg.mxu0
    %v242 = vld [vmem:[%s1] sm:$0x1]
    %v243 = vlaneseq
    %v244 = vshrl.u32 %v243, 7
    %v245 = vperm.slane %v242, 0
    %vm246 = vcmp.eq.s32.totalorder %v245, %v244
    %v247 = vsel %vm246, 1, 0
    %v248 = vcvt.s32.f32 %v247
    %vm249 = vcmask 64512
    %v251 = vsel %vm249, %v248, 0
    %253 = vmatpush.msra.mxu0 0.0
    %254 = vmatpush.msra.mxu0 0.0
    %255 = vmatpush.msra.mxu0 0.0
    %256 = vmatpush.msra.mxu0 0.0
    %257 = vmatpush.msra.mxu0 0.0
    %258 = vmatpush.msra.mxu0 0.0
    %259 = vmatpush.msra.mxu0 0.0
    %260 = vmatpush.msra.mxu0 0.0
    %261 = vmatpush.msra.mxu0 0.0
    %262 = vmatpush.msra.mxu0 0.0
    %263 = vmatpush.msra.mxu0 0.0
    %264 = vmatpush.msra.mxu0 0.0
    %265 = vmatpush.msra.mxu0 0.0
    %266 = vmatpush.msra.mxu0 0.0
    %267 = vmatpush.msra.mxu0 0.0
    %268 = vmatpush.msra.mxu0 %v240
    %269 = vmatmul.f32.gmra.mxu0 %v251
    %v270 = vpop.f32.mrf.mxu0
    %v271 = vadd.f32 0.0, %v270
    %272 = vdwg.mxu0
    %v273 = vsel %vm249, %v248, 0.0
    %274 = vadd.xlane.f32.xlu0 %v273
    %v275 = vpop.xlane.xlu0 %274
    %v276 = vld [vmem:[%s5] sm:$0xff]
    %v277 = vadd.f32 %v276, %v271
    %v278 = vld [vmem:[%s6] sm:$0xff]
    %v279 = vadd.f32 %v278, %v275
    %vm280 = vcmp.gt.f32.partialorder %v275, 0.0
    %v281 = vmax.f32 %v279, 1.0
    %v282 = vrcp.pop %v281
    %v283 = vmul.f32 %v281, %v282
    %v284 = vsub.f32 1.0, %v283
    %v285 = vmul.f32 %v282, %v284
    %v286 = vadd.f32 %v282, %v285
    %vm287 = vweird.f32 %v281
    %vm288 = vweird.f32 %v282
    %vm289 = vmor %vm287, %vm288
    %v290 = vsel %vm289, %v282, %v286
    %v291 = vand.u32 2147483647, %v281
    %vm292 = vcmp.eq.f32.partialorder %v291, 8.507059e+37
    %v293 = vand.u32 %v281, 2147483648
    %v294 = vor.u32 1.1754944e-38, %v293
    %v295 = vsel %vm292, %v294, %v290
    %297 = vset.pattern.permute.xlu0 0
    %298 = vperm.xlu0 %297, %v295
    %v299 = vpop.permute.xlu0 %298
    %v301 = vmul.f32 %v277, %v299
    %v302 = vld [vmem:[%s4] sm:$0xff]
    %v303 = vsel %vm280, 1, 0
    %vm304 = vcmp.eq.s32.totalorder %v303, 1
    %v305 = vsel %vm304, %v301, %v302
    %306 = vst [vmem:[%s14] sm:$0xff] %v305
    %307 = vst [vmem:[%s15] sm:$0xff] %v277
    %vm308 = vcmask 7168
    %309 = vst.msk [vmem:[%s16] sm:$0xff] %vm308, %v279
    %v310 = vld [vmem:[%s7] sm:$0xff]
    %v311 = vld [vmem:[%s7 + $0x8] sm:$0xff]
    %v312 = vld [vmem:[%s7 + $0x10] sm:$0xff]
    %v313 = vld [vmem:[%s7 + $0x18] sm:$0xff]
    %v314 = vld [vmem:[%s7 + $0x20] sm:$0xff]
    %v315 = vld [vmem:[%s7 + $0x28] sm:$0xff]
    %v316 = vld [vmem:[%s7 + $0x30] sm:$0xff]
    %v317 = vld [vmem:[%s7 + $0x38] sm:$0xff]
    %v318 = vld [vmem:[%s7 + $0x40] sm:$0xff]
    %v319 = vld [vmem:[%s7 + $0x48] sm:$0xff]
    %v320 = vld [vmem:[%s7 + $0x50] sm:$0xff]
    %v321 = vld [vmem:[%s7 + $0x58] sm:$0xff]
    %v322 = vld [vmem:[%s7 + $0x60] sm:$0xff]
    %v323 = vld [vmem:[%s7 + $0x68] sm:$0xff]
    %v324 = vld [vmem:[%s7 + $0x70] sm:$0xff]
    %v325 = vld [vmem:[%s7 + $0x78] sm:$0xff]
    %326 = vmatpush.msra.mxu0 %v325
    %327 = vmatpush.msra.mxu0 %v324
    %328 = vmatpush.msra.mxu0 %v323
    %329 = vmatpush.msra.mxu0 %v322
    %330 = vmatpush.msra.mxu0 %v321
    %331 = vmatpush.msra.mxu0 %v320
    %332 = vmatpush.msra.mxu0 %v319
    %333 = vmatpush.msra.mxu0 %v318
    %334 = vmatpush.msra.mxu0 %v317
    %335 = vmatpush.msra.mxu0 %v316
    %336 = vmatpush.msra.mxu0 %v315
    %337 = vmatpush.msra.mxu0 %v314
    %338 = vmatpush.msra.mxu0 %v313
    %339 = vmatpush.msra.mxu0 %v312
    %340 = vmatpush.msra.mxu0 %v311
    %341 = vmatpush.msra.mxu0 %v310
    %342 = vmatmul.f32.gmra.mxu0 %v240
    %v343 = vpop.f32.mrf.mxu0
    %v344 = vadd.f32 0.0, %v343
    %345 = vdwg.mxu0
    %v346 = vld [vmem:[%s8] sm:$0xff]
    %v347 = vld [vmem:[%s8 + $0x8] sm:$0xff]
    %v348 = vld [vmem:[%s8 + $0x10] sm:$0xff]
    %v349 = vld [vmem:[%s8 + $0x18] sm:$0xff]
    %v350 = vld [vmem:[%s8 + $0x20] sm:$0xff]
    %v351 = vld [vmem:[%s8 + $0x28] sm:$0xff]
    %v352 = vld [vmem:[%s8 + $0x30] sm:$0xff]
    %v353 = vld [vmem:[%s8 + $0x38] sm:$0xff]
    %v354 = vld [vmem:[%s8 + $0x40] sm:$0xff]
    %v355 = vld [vmem:[%s8 + $0x48] sm:$0xff]
    %v356 = vld [vmem:[%s8 + $0x50] sm:$0xff]
    %v357 = vld [vmem:[%s8 + $0x58] sm:$0xff]
    %v358 = vld [vmem:[%s8 + $0x60] sm:$0xff]
    %v359 = vld [vmem:[%s8 + $0x68] sm:$0xff]
    %v360 = vld [vmem:[%s8 + $0x70] sm:$0xff]
    %v361 = vld [vmem:[%s8 + $0x78] sm:$0xff]
    %v362 = vld [vmem:[%s8 + $0x80] sm:$0xff]
    %v363 = vld [vmem:[%s8 + $0x88] sm:$0xff]
    %v364 = vld [vmem:[%s8 + $0x90] sm:$0xff]
    %v365 = vld [vmem:[%s8 + $0x98] sm:$0xff]
    %v366 = vld [vmem:[%s8 + $0xa0] sm:$0xff]
    %v367 = vld [vmem:[%s8 + $0xa8] sm:$0xff]
    %v368 = vld [vmem:[%s8 + $0xb0] sm:$0xff]
    %v369 = vld [vmem:[%s8 + $0xb8] sm:$0xff]
    %v370 = vld [vmem:[%s8 + $0xc0] sm:$0xff]
    %v371 = vld [vmem:[%s8 + $0xc8] sm:$0xff]
    %v372 = vld [vmem:[%s8 + $0xd0] sm:$0xff]
    %v373 = vld [vmem:[%s8 + $0xd8] sm:$0xff]
    %v374 = vld [vmem:[%s8 + $0xe0] sm:$0xff]
    %v375 = vld [vmem:[%s8 + $0xe8] sm:$0xff]
    %v376 = vld [vmem:[%s8 + $0xf0] sm:$0xff]
    %v377 = vld [vmem:[%s8 + $0xf8] sm:$0xff]
    %378 = vmatpush.msra.mxu0 %v376
    %379 = vmatpush.msra.mxu0 %v374
    %380 = vmatpush.msra.mxu0 %v372
    %381 = vmatpush.msra.mxu0 %v370
    %382 = vmatpush.msra.mxu0 %v368
    %383 = vmatpush.msra.mxu0 %v366
    %384 = vmatpush.msra.mxu0 %v364
    %385 = vmatpush.msra.mxu0 %v362
    %386 = vmatpush.msra.mxu0 %v360
    %387 = vmatpush.msra.mxu0 %v358
    %388 = vmatpush.msra.mxu0 %v356
    %389 = vmatpush.msra.mxu0 %v354
    %390 = vmatpush.msra.mxu0 %v352
    %391 = vmatpush.msra.mxu0 %v350
    %392 = vmatpush.msra.mxu0 %v348
    %393 = vmatpush.msra.mxu0 %v346
    %394 = vmatmul.f32.gmra.mxu0 %v305
    %v395 = vpop.f32.mrf.mxu0
    %v396 = vadd.f32 0.0, %v395
    %397 = vdwg.mxu0
    %398 = vmatpush.msra.mxu0 %v377
    %399 = vmatpush.msra.mxu0 %v375
    %400 = vmatpush.msra.mxu0 %v373
    %401 = vmatpush.msra.mxu0 %v371
    %402 = vmatpush.msra.mxu0 %v369
    %403 = vmatpush.msra.mxu0 %v367
    %404 = vmatpush.msra.mxu0 %v365
    %405 = vmatpush.msra.mxu0 %v363
    %406 = vmatpush.msra.mxu0 %v361
    %407 = vmatpush.msra.mxu0 %v359
    %408 = vmatpush.msra.mxu0 %v357
    %409 = vmatpush.msra.mxu0 %v355
    %410 = vmatpush.msra.mxu0 %v353
    %411 = vmatpush.msra.mxu0 %v351
    %412 = vmatpush.msra.mxu0 %v349
    %413 = vmatpush.msra.mxu0 %v347
    %414 = vmatmul.f32.gmra.mxu0 %v305
    %v415 = vpop.f32.mrf.mxu0
    %v416 = vadd.f32 0.0, %v415
    %417 = vdwg.mxu0
    %418 = vmatpush.xpose.msra.mxu0 0.0
    %419 = vmatpush.xpose.msra.mxu0 0.0
    %420 = vmatpush.xpose.msra.mxu0 0.0
    %421 = vmatpush.xpose.msra.mxu0 0.0
    %422 = vmatpush.xpose.msra.mxu0 0.0
    %423 = vmatpush.xpose.msra.mxu0 0.0
    %424 = vmatpush.xpose.msra.mxu0 0.0
    %425 = vmatpush.xpose.msra.mxu0 0.0
    %426 = vmatpush.xpose.msra.mxu0 0.0
    %427 = vmatpush.xpose.msra.mxu0 0.0
    %428 = vmatpush.xpose.msra.mxu0 0.0
    %429 = vmatpush.xpose.msra.mxu0 0.0
    %430 = vmatpush.xpose.msra.mxu0 0.0
    %431 = vmatpush.xpose.msra.mxu0 0.0
    %432 = vmatpush.xpose.msra.mxu0 0.0
    %433 = vmatpush.xpose.msra.mxu0 %v396
    %434 = vmatmul.f32.gmra.mxu0 %v344
    %v435 = vpop.f32.mrf.mxu0
    %v436 = vadd.f32 0.0, %v435
    %437 = vdwg.mxu0
    %v438 = vmul.f32 %v436, 0.088388346
    %v439 = vsel %vm249, %v438, -inf
    %440 = vmax.xlane.f32.xlu0 %v439
    %v441 = vpop.xlane.xlu0 %440
    %v442 = vsub.f32 %v438, %v441
    %v443 = vmul.f32 %v442, 1.442695
    %v444 = vpow.pop %v443
    %v445 = vsel %vm249, %v444, 0.0
    %446 = vadd.xlane.f32.xlu0 %v445
    %v447 = vpop.xlane.xlu0 %446
    %v448 = vrcp.pop %v447
    %v449 = vmul.f32 %v444, %v448
    %v451 = vsel %vm249, %v449, 0
    %453 = vmatpush.msra.mxu0 0.0
    %454 = vmatpush.msra.mxu0 0.0
    %455 = vmatpush.msra.mxu0 0.0
    %456 = vmatpush.msra.mxu0 0.0
    %457 = vmatpush.msra.mxu0 0.0
    %458 = vmatpush.msra.mxu0 0.0
    %459 = vmatpush.msra.mxu0 0.0
    %460 = vmatpush.msra.mxu0 0.0
    %461 = vmatpush.msra.mxu0 0.0
    %462 = vmatpush.msra.mxu0 0.0
    %463 = vmatpush.msra.mxu0 0.0
    %464 = vmatpush.msra.mxu0 0.0
    %465 = vmatpush.msra.mxu0 0.0
    %466 = vmatpush.msra.mxu0 0.0
    %467 = vmatpush.msra.mxu0 0.0
    %468 = vmatpush.msra.mxu0 %v416
    %469 = vmatmul.f32.gmra.mxu0 %v451
    %v470 = vpop.f32.mrf.mxu0
    %v471 = vadd.f32 0.0, %v470
    %472 = vdwg.mxu0
    %473 = vst [vmem:[#allocation6] sm:$0xff] %v240
    %474 = vst [vmem:[#allocation6 + $0x8] sm:$0xff] %v471
    %v475 = vld [vmem:[%s9] sm:$0xff]
    %v476 = vld [vmem:[%s9 + $0x8] sm:$0xff]
    %v477 = vld [vmem:[%s9 + $0x10] sm:$0xff]
    %v478 = vld [vmem:[%s9 + $0x18] sm:$0xff]
    %v479 = vld [vmem:[%s9 + $0x20] sm:$0xff]
    %v480 = vld [vmem:[%s9 + $0x28] sm:$0xff]
    %v481 = vld [vmem:[%s9 + $0x30] sm:$0xff]
    %v482 = vld [vmem:[%s9 + $0x38] sm:$0xff]
    %v483 = vld [vmem:[%s9 + $0x40] sm:$0xff]
    %v484 = vld [vmem:[%s9 + $0x48] sm:$0xff]
    %v485 = vld [vmem:[%s9 + $0x50] sm:$0xff]
    %v486 = vld [vmem:[%s9 + $0x58] sm:$0xff]
    %v487 = vld [vmem:[%s9 + $0x60] sm:$0xff]
    %v488 = vld [vmem:[%s9 + $0x68] sm:$0xff]
    %v489 = vld [vmem:[%s9 + $0x70] sm:$0xff]
    %v490 = vld [vmem:[%s9 + $0x78] sm:$0xff]
    %v491 = vld [vmem:[#allocation2] sm:$0xff]
    %v492 = vld [vmem:[#allocation2 + $0x8] sm:$0xff]
    %v493 = vld [vmem:[#allocation2 + $0x10] sm:$0xff]
    %v494 = vld [vmem:[#allocation2 + $0x18] sm:$0xff]
    %v495 = vld [vmem:[#allocation2 + $0x20] sm:$0xff]
    %v496 = vld [vmem:[#allocation2 + $0x28] sm:$0xff]
    %v497 = vld [vmem:[#allocation2 + $0x30] sm:$0xff]
    %v498 = vld [vmem:[#allocation2 + $0x38] sm:$0xff]
    %v499 = vld [vmem:[#allocation2 + $0x40] sm:$0xff]
    %v500 = vld [vmem:[#allocation2 + $0x48] sm:$0xff]
    %v501 = vld [vmem:[#allocation2 + $0x50] sm:$0xff]
    %v502 = vld [vmem:[#allocation2 + $0x58] sm:$0xff]
    %v503 = vld [vmem:[#allocation2 + $0x60] sm:$0xff]
    %v504 = vld [vmem:[#allocation2 + $0x68] sm:$0xff]
    %v505 = vld [vmem:[#allocation2 + $0x70] sm:$0xff]
    %v506 = vld [vmem:[#allocation2 + $0x78] sm:$0xff]
    %507 = vmatpush.msra.mxu0 %v506
    %508 = vmatpush.msra.mxu0 %v505
    %509 = vmatpush.msra.mxu0 %v504
    %510 = vmatpush.msra.mxu0 %v503
    %511 = vmatpush.msra.mxu0 %v502
    %512 = vmatpush.msra.mxu0 %v501
    %513 = vmatpush.msra.mxu0 %v500
    %514 = vmatpush.msra.mxu0 %v499
    %515 = vmatpush.msra.mxu0 %v498
    %516 = vmatpush.msra.mxu0 %v497
    %517 = vmatpush.msra.mxu0 %v496
    %518 = vmatpush.msra.mxu0 %v495
    %519 = vmatpush.msra.mxu0 %v494
    %520 = vmatpush.msra.mxu0 %v493
    %521 = vmatpush.msra.mxu0 %v492
    %522 = vmatpush.msra.mxu0 %v491
    %523 = vmatmul.f32.gmra.mxu0 %v471
    %v524 = vpop.f32.mrf.mxu0
    %v525 = vadd.f32 0.0, %v524
    %526 = vdwg.mxu0
    %527 = vmatpush.msra.mxu0 %v490
    %528 = vmatpush.msra.mxu0 %v489
    %529 = vmatpush.msra.mxu0 %v488
    %530 = vmatpush.msra.mxu0 %v487
    %531 = vmatpush.msra.mxu0 %v486
    %532 = vmatpush.msra.mxu0 %v485
    %533 = vmatpush.msra.mxu0 %v484
    %534 = vmatpush.msra.mxu0 %v483
    %535 = vmatpush.msra.mxu0 %v482
    %536 = vmatpush.msra.mxu0 %v481
    %537 = vmatpush.msra.mxu0 %v480
    %538 = vmatpush.msra.mxu0 %v479
    %539 = vmatpush.msra.mxu0 %v478
    %540 = vmatpush.msra.mxu0 %v477
    %541 = vmatpush.msra.mxu0 %v476
    %542 = vmatpush.msra.mxu0 %v475
    %543 = vmatmul.f32.gmra.mxu0 %v240
    %v544 = vpop.f32.mrf.mxu0
    %v545 = vadd.f32 %v525, %v544
    %546 = vdwg.mxu0
    %v547 = vld [vmem:[%s11] sm:$0x1]
    %v549 = vperm.slane %v547, 0
    %v551 = vadd.f32 %v545, %v549
    %552 = vst [vmem:[#allocation5] sm:$0xff] %v551
    // Predicated region
    $region54: #{cafenet_forward.1} parent=1 // pred_check
      _
    $region55: #{cafenet_forward.1} parent=1 // pred_check_branch
      %554 = sbr.rel (0) target = $region57
    $region56: #{cafenet_forward.1} parent=1 // pred_region
      %556 = vsyncadd [#allocation4], 0
      %s558 = sshll.u32 [#allocation5], 4
      %s559 = int_to_ptr.vmem [resolvable:$true] %s558
      %s560 = sshll.u32 %s12, 4
      %s561 = int_to_ptr.hbm [resolvable:$true] %s560
      %563 = dma.vmem_to_hbm [thread:$0]  %s559, 128, %s561, [#allocation4]
    $region57: #{cafenet_forward.1} parent=1 // pred_fallthru
      _
    // Predicated region
    $region58: #{cafenet_forward.1} parent=1 // pred_check
      _
    $region59: #{cafenet_forward.1} parent=1 // pred_check_branch
      %565 = sbr.rel (0) target = $region61
    $region60: #{cafenet_forward.1} parent=1 // pred_region
      %567 = vsyncadd [#allocation7], 0
      %s569 = sshll.u32 [#allocation6], 4
      %s570 = int_to_ptr.vmem [resolvable:$true] %s569
      %s571 = sshll.u32 %s13, 4
      %s572 = int_to_ptr.hbm [resolvable:$true] %s571
      %574 = dma.vmem_to_hbm [thread:$0]  %s570, 256, %s572, [#allocation7]
    $region61: #{cafenet_forward.1} parent=1 // pred_fallthru
      _
    // Predicated region
    $region62: #{cafenet_forward.1} parent=1 // pred_check
      _
    $region63: #{cafenet_forward.1} parent=1 // pred_check_branch
      %576 = sbr.rel (0) target = $region65
    $region64: #{cafenet_forward.1} parent=1 // pred_region
      _
    $region65: #{cafenet_forward.1} parent=1 // pred_fallthru
      _
    // Predicated region
    $region66: #{cafenet_forward.1} parent=1 // pred_check
      _
    $region67: #{cafenet_forward.1} parent=1 // pred_check_branch
      %578 = sbr.rel (0) target = $region69
    $region68: #{cafenet_forward.1} parent=1 // pred_region
      _
    $region69: #{cafenet_forward.1} parent=1 // pred_fallthru
      _
    // Predicated region
    $region70: #{cafenet_forward.1} parent=1 // pred_check
      _
    $region71: #{cafenet_forward.1} parent=1 // pred_check_branch
      %580 = sbr.rel (0) target = $region73
    $region72: #{cafenet_forward.1} parent=1 // pred_region
      _
    $region73: #{cafenet_forward.1} parent=1 // pred_fallthru
      _
    // Predicated region
    $region74: #{cafenet_forward.1} parent=1 // pred_check
      _
    $region75: #{cafenet_forward.1} parent=1 // pred_check_branch
      %582 = sbr.rel (0) target = $region77
    $region76: #{cafenet_forward.1} parent=1 // pred_region
      %584 = dma.done [#allocation4], 128
    $region77: #{cafenet_forward.1} parent=1 // pred_fallthru
      _
    // Predicated region
    $region78: #{cafenet_forward.1} parent=1 // pred_check
      _
    $region79: #{cafenet_forward.1} parent=1 // pred_check_branch
      %586 = sbr.rel (0) target = $region81
    $region80: #{cafenet_forward.1} parent=1 // pred_region
      %588 = dma.done [#allocation7], 256
    $region81: #{cafenet_forward.1} parent=1 // pred_fallthru
      _
    // Predicated region
    $region82: #{cafenet_forward.1} parent=1 // pred_check
      _
    $region83: #{cafenet_forward.1} parent=1 // pred_check_branch
      %590 = sbr.rel (0) target = $region85
    $region84: #{cafenet_forward.1} parent=1 // pred_region
      _
    $region85: #{cafenet_forward.1} parent=1 // pred_fallthru
      _
    // Predicated region
    $region86: #{cafenet_forward.1} parent=1 // pred_check
      _
    $region87: #{cafenet_forward.1} parent=1 // pred_check_branch
      %592 = sbr.rel (0) target = $region89
    $region88: #{cafenet_forward.1} parent=1 // pred_region
      _
    $region89: #{cafenet_forward.1} parent=1 // pred_fallthru
      _
    // Predicated region
    $region90: #{cafenet_forward.1} parent=1 // pred_check
      _
    $region91: #{cafenet_forward.1} parent=1 // pred_check_branch
      %594 = sbr.rel (0) target = $region93
    $region92: #{cafenet_forward.1} parent=1 // pred_region
      _
    $region93: #{cafenet_forward.1} parent=1 // pred_fallthru
      _
    %595 = vsyncpa [#allocation3], 1
    %596 = vsyncpa [#allocation4], 1
    %597 = vsyncpa [#allocation7], 1

</llo_original>
